<compile_context>
chip_gen: v6e
topology: v6e:2x2x1
jax: 0.10.0
libtpu: 0.0.40
codegen_flags: <defaults>
</compile_context>

<pallas_src>
import functools

import jax
import jax.numpy as jnp
from jax import lax
from jax.experimental import pallas as pl
from jax.experimental.pallas import tpu as pltpu

_LANE = 128
_SUBLANE = 8


def _vmem_budget():
    """Per-generation budgets: (vmem_limit_bytes, block_working_set_budget)."""
    try:
        cap = int(pltpu.get_tpu_info().vmem_capacity_bytes)
    except Exception:
        cap = 64 * 1024 * 1024  # conservative default: assume v7x-sized VMEM
    vmem_limit = max(min((cap * 3) // 4, 96 * 1024 * 1024), 32 * 1024 * 1024)
    # Budget for the 2x double-buffered (input + output) blocks; the other half
    # of the limit is headroom for f32 intermediates + gamma/beta/stat buffers.
    block_budget = max(vmem_limit // 2, 8 * 1024 * 1024)
    return vmem_limit, block_budget


def _choose_lane_tile(n_rows, c_pad, block_budget, max_lane_tile):
    """Channel-tile width (multiple of 128) for the full-batch path."""
    total_groups = c_pad // _LANE
    groups = max(1, min(total_groups, max(1, max_lane_tile // _LANE)))
    # >= 2 channel tiles whenever possible so v7x's two TensorCores both get work.
    if total_groups >= 2:
        groups = min(groups, pl.cdiv(total_groups, 2))
    # 2 in-buffers + 2 out-buffers, budgeted at f32 width for safety.
    per_group_bytes = 4 * n_rows * _LANE * 4
    while groups > 1 and groups * per_group_bytes > block_budget:
        groups -= 1
    return groups * _LANE


def _choose_fallback_tiles(c_pad, block_budget, max_lane_tile):
    """(batch_tile, lane_tile) for the batch-tiled large-N fallback."""
    total_groups = c_pad // _LANE
    groups = max(1, min(total_groups, max(1, max_lane_tile // _LANE)))
    if total_groups >= 2:
        groups = min(groups, pl.cdiv(total_groups, 2))
    while groups > 1 and 4 * _SUBLANE * groups * _LANE * 4 > block_budget:
        groups -= 1
    tc = groups * _LANE
    bn = max(_SUBLANE, (block_budget // (4 * tc * 4)) // _SUBLANE * _SUBLANE)
    bn = min(bn, 4096)
    return bn, tc


def _bn_fullbatch_kernel(x_ref, gamma_ref, beta_ref, o_ref, *, eps, n_rows):
    """Full batch resident: two-pass stats + fused affine, all within one block."""
    inv_n = jnp.float32(1.0 / n_rows)
    # Pass 1: mean (sublane reduction -> XLU slot; cost is essentially the loads).
    mean = jnp.sum(x_ref[...].astype(jnp.float32), axis=0, keepdims=True) * inv_n
    # Pass 2: centered variance (two-pass -> no E[x^2]-E[x]^2 cancellation).
    # x is re-read from VMEM each pass to keep live ranges short (no spills).
    d = x_ref[...].astype(jnp.float32) - mean
    var = jnp.sum(d * d, axis=0, keepdims=True) * inv_n
    inv_std = lax.rsqrt(var + jnp.float32(eps))
    scale = gamma_ref[...].astype(jnp.float32) * inv_std          # (1, TC)
    shift = beta_ref[...].astype(jnp.float32) - mean * scale      # (1, TC)
    # Pass 3: fused affine, re-reading x from VMEM (2 VPU ops / element).
    o_ref[...] = (x_ref[...].astype(jnp.float32) * scale + shift).astype(o_ref.dtype)


def _bn_stats_kernel(x_ref, stat_ref):
    """Accumulate per-channel [sum; sumsq] over batch tiles (reduction axis = grid 1)."""
    @pl.when(pl.program_id(1) == 0)
    def _():
        stat_ref[...] = jnp.zeros_like(stat_ref)

    x = x_ref[...].astype(jnp.float32)
    s = jnp.sum(x, axis=0, keepdims=True)
    sq = jnp.sum(x * x, axis=0, keepdims=True)
    stat_ref[...] += jnp.concatenate([s, sq], axis=0)


def _bn_normalize_kernel(stat_ref, gamma_ref, beta_ref, x_ref, o_ref, *, eps, n_rows):
    """Second pass of the fallback: y = x*scale + shift from precomputed stats."""
    inv_n = jnp.float32(1.0 / n_rows)
    st = stat_ref[...]                                             # (2, TC) f32
    mean = st[0:1, :] * inv_n
    var = jnp.maximum(st[1:2, :] * inv_n - mean * mean, 0.0)
    inv_std = lax.rsqrt(var + jnp.float32(eps))
    scale = gamma_ref[...].astype(jnp.float32) * inv_std
    shift = beta_ref[...].astype(jnp.float32) - mean * scale
    o_ref[...] = (x_ref[...].astype(jnp.float32) * scale + shift).astype(o_ref.dtype)


def batchnorm1d(x, gamma, beta, eps=1e-5, *, max_lane_tile=8192, force_batch_tile=None):
    """Training-mode BatchNorm1d forward.

    x: (N, C) float array (f32 or bf16); gamma, beta: (C,) affine params.
    force_batch_tile: test hook that forces the batch-tiled fallback path.
    """
    N, C = x.shape
    out_dtype = x.dtype
    vmem_limit, block_budget = _vmem_budget()

    # Pad channels to a multiple of 128 -> lane-dense (unmasked) stores.
    c_pad = pl.cdiv(C, _LANE) * _LANE
    if c_pad != C:
        x_p = jnp.pad(x, ((0, 0), (0, c_pad - C)))
        gamma_p = jnp.pad(gamma.astype(jnp.float32), (0, c_pad - C), constant_values=1.0)
        beta_p = jnp.pad(beta.astype(jnp.float32), (0, c_pad - C))
    else:
        x_p = x
        gamma_p = gamma.astype(jnp.float32)
        beta_p = beta.astype(jnp.float32)
    gamma2d = gamma_p.reshape(1, c_pad)
    beta2d = beta_p.reshape(1, c_pad)

    tc = _choose_lane_tile(N, c_pad, block_budget, max_lane_tile)
    full_batch_fits = 4 * N * tc * 4 <= block_budget
    use_fallback = (force_batch_tile is not None) or (not full_batch_fits)

    if not use_fallback:
        # --- Primary path: full batch per block, 1-D grid over channel tiles.
        y = pl.pallas_call(
            functools.partial(_bn_fullbatch_kernel, eps=eps, n_rows=N),
            out_shape=jax.ShapeDtypeStruct((N, c_pad), out_dtype),
            grid_spec=pltpu.PrefetchScalarGridSpec(
                num_scalar_prefetch=0,
                grid=(pl.cdiv(c_pad, tc),),
                in_specs=[
                    pl.BlockSpec((N, tc), lambda j: (0, j)),
                    pl.BlockSpec((1, tc), lambda j: (0, j)),
                    pl.BlockSpec((1, tc), lambda j: (0, j)),
                ],
                out_specs=pl.BlockSpec((N, tc), lambda j: (0, j)),
            ),
            compiler_params=pltpu.CompilerParams(
                dimension_semantics=("parallel",),
                vmem_limit_bytes=vmem_limit,
            ),
        )(x_p, gamma2d, beta2d)
        return y[:, :C] if c_pad != C else y

    # --- Large-N fallback: batch-tiled two-pass (stats pallas_call + normalize).
    if force_batch_tile is not None:
        bn = max(_SUBLANE, (int(force_batch_tile) // _SUBLANE) * _SUBLANE)
    else:
        bn, tc = _choose_fallback_tiles(c_pad, block_budget, max_lane_tile)
    bn = min(bn, pl.cdiv(N, _SUBLANE) * _SUBLANE)
    n_pad = pl.cdiv(N, bn) * bn
    if n_pad != N:
        # Zero rows contribute nothing to sum/sumsq; divisor stays the true N.
        x_p = jnp.pad(x_p, ((0, n_pad - N), (0, 0)))

    c_tiles = pl.cdiv(c_pad, tc)
    n_tiles = n_pad // bn

    stats = pl.pallas_call(
        _bn_stats_kernel,
        out_shape=jax.ShapeDtypeStruct((2, c_pad), jnp.float32),
        grid_spec=pltpu.PrefetchScalarGridSpec(
            num_scalar_prefetch=0,
            grid=(c_tiles, n_tiles),
            in_specs=[pl.BlockSpec((bn, tc), lambda j, i: (i, j))],
            out_specs=pl.BlockSpec((2, tc), lambda j, i: (0, j)),
        ),
        compiler_params=pltpu.CompilerParams(
            dimension_semantics=("parallel", "arbitrary"),
            vmem_limit_bytes=vmem_limit,
        ),
    )(x_p)

    y = pl.pallas_call(
        functools.partial(_bn_normalize_kernel, eps=eps, n_rows=N),
        out_shape=jax.ShapeDtypeStruct((n_pad, c_pad), out_dtype),
        grid_spec=pltpu.PrefetchScalarGridSpec(
            num_scalar_prefetch=0,
            grid=(c_tiles, n_tiles),
            in_specs=[
                pl.BlockSpec((2, tc), lambda j, i: (0, j)),
                pl.BlockSpec((1, tc), lambda j, i: (0, j)),
                pl.BlockSpec((1, tc), lambda j, i: (0, j)),
                pl.BlockSpec((bn, tc), lambda j, i: (i, j)),
            ],
            out_specs=pl.BlockSpec((bn, tc), lambda j, i: (i, j)),
        ),
        compiler_params=pltpu.CompilerParams(
            dimension_semantics=("parallel", "parallel"),
            vmem_limit_bytes=vmem_limit,
        ),
    )(stats, gamma2d, beta2d, x_p)

    return y[:N, :C]


if __name__ == "__main__":
    key = jax.random.PRNGKey(0)
    kx, kg, kb = jax.random.split(key, 3)

    def ref_bn(x, g, b, eps=1e-5):
        xf = x.astype(jnp.float32)
        m = jnp.mean(xf, axis=0, keepdims=True)
        v = jnp.mean((xf - m) ** 2, axis=0, keepdims=True)
        return ((xf - m) / jnp.sqrt(v + eps) * g.astype(jnp.float32)[None, :]
                + b.astype(jnp.float32)[None, :])

    # Per-channel affine params (PyTorch default init is gamma=1, beta=0; perturb
    # deterministically so the affine path is exercised).
    C = 256
    gamma = 1.0 + 0.1 * jax.random.normal(kg, (C,), dtype=jnp.float32)
    beta = 0.1 * jax.random.normal(kb, (C,), dtype=jnp.float32)

    # 1) f32, lane-dense C (multiple of 128): primary full-batch path, 2 channel tiles.
    N = 8
    x = jax.random.normal(kx, (N, C), dtype=jnp.float32)
    out = jax.block_until_ready(batchnorm1d(x, gamma, beta))
    assert out.shape == (N, C) and out.dtype == x.dtype
    assert jnp.max(jnp.abs(out - ref_bn(x, gamma, beta))) < 1e-4, "mismatch (f32 primary)"

    # 2) small C (< 128): wrapper pads channels to 128 for lane-dense stores.
    Ns, Cs = 8, 32
    xs = jax.random.normal(kx, (Ns, Cs), dtype=jnp.float32)
    outs = jax.block_until_ready(batchnorm1d(xs, gamma[:Cs], beta[:Cs]))
    assert outs.shape == (Ns, Cs)
    assert jnp.max(jnp.abs(outs - ref_bn(xs, gamma[:Cs], beta[:Cs]))) < 1e-4, "mismatch (small C)"

    # 3) bf16 I/O path (stats still accumulated in f32).
    Nb = 16
    xb = jax.random.normal(kx, (Nb, C), dtype=jnp.float32).astype(jnp.bfloat16)
    outb = jax.block_until_ready(batchnorm1d(xb, gamma, beta))
    assert outb.dtype == jnp.bfloat16 and outb.shape == (Nb, C)
    assert jnp.max(jnp.abs(outb.astype(jnp.float32) - ref_bn(xb, gamma, beta))) < 5e-2, \
        "mismatch (bf16 I/O)"

    # 4) batch-tiled large-N fallback path (forced at small shapes for validation).
    Nf = 64
    xf = jax.random.normal(kx, (Nf, C), dtype=jnp.float32)
    outf = jax.block_until_ready(batchnorm1d(xf, gamma, beta, force_batch_tile=16))
    assert outf.shape == (Nf, C)
    assert jnp.max(jnp.abs(outf - ref_bn(xf, gamma, beta))) < 1e-4, "mismatch (batch-tiled)"

    print("KERNEL_OK")
</pallas_src>

<mosaic_0001>
module attributes {stable_mosaic.version = 11 : i64} {
  func.func @_bn_fullbatch_kernel(%arg0: i32, %arg1: memref<8x128xf32, #tpu.memory_space<vmem>>, %arg2: memref<1x128xf32, #tpu.memory_space<vmem>>, %arg3: memref<1x128xf32, #tpu.memory_space<vmem>>, %arg4: memref<8x128xf32, #tpu.memory_space<vmem>>) attributes {dimension_semantics = [#tpu.dimension_semantics<parallel>], iteration_bounds = array<i64: 2>, scalar_prefetch = 0 : i64, scratch_operands = 0 : i64, tpu.core_type = #tpu.core_type<tc>, window_params = [{transform_indices = @transform_0, window_bounds = array<i64: 8, 128>}, {transform_indices = @transform_1, window_bounds = array<i64: 1, 128>}, {transform_indices = @transform_2, window_bounds = array<i64: 1, 128>}, {transform_indices = @transform_3, window_bounds = array<i64: 8, 128>}]} {
    %c0 = arith.constant 0 : index
    %c0_0 = arith.constant 0 : index
    %0 = vector.load %arg1[%c0, %c0_0] : memref<8x128xf32, #tpu.memory_space<vmem>>, vector<8x128xf32>
    %cst = arith.constant dense<0.000000e+00> : vector<128xf32>
    %1 = vector.multi_reduction <add>, %0, %cst [0] : vector<8x128xf32> to vector<128xf32>
    %2 = vector.shape_cast %1 : vector<128xf32> to vector<1x128xf32>
    %cst_1 = arith.constant 1.250000e-01 : f32
    %3 = vector.broadcast %cst_1 : f32 to vector<1x128xf32>
    %4 = arith.mulf %2, %3 : vector<1x128xf32>
    %c0_2 = arith.constant 0 : index
    %c0_3 = arith.constant 0 : index
    %5 = vector.load %arg1[%c0_2, %c0_3] : memref<8x128xf32, #tpu.memory_space<vmem>>, vector<8x128xf32>
    %6 = vector.broadcast %4 : vector<1x128xf32> to vector<8x128xf32>
    %7 = arith.subf %5, %6 : vector<8x128xf32>
    %8 = arith.mulf %7, %7 : vector<8x128xf32>
    %cst_4 = arith.constant dense<0.000000e+00> : vector<128xf32>
    %9 = vector.multi_reduction <add>, %8, %cst_4 [0] : vector<8x128xf32> to vector<128xf32>
    %10 = vector.shape_cast %9 : vector<128xf32> to vector<1x128xf32>
    %cst_5 = arith.constant 1.250000e-01 : f32
    %11 = vector.broadcast %cst_5 : f32 to vector<1x128xf32>
    %12 = arith.mulf %10, %11 : vector<1x128xf32>
    %cst_6 = arith.constant 9.99999974E-6 : f32
    %13 = vector.broadcast %cst_6 : f32 to vector<1x128xf32>
    %14 = arith.addf %12, %13 : vector<1x128xf32>
    %15 = math.rsqrt %14 : vector<1x128xf32>
    %c0_7 = arith.constant 0 : index
    %c0_8 = arith.constant 0 : index
    %16 = vector.load %arg2[%c0_7, %c0_8] : memref<1x128xf32, #tpu.memory_space<vmem>>, vector<1x128xf32>
    %17 = arith.mulf %16, %15 : vector<1x128xf32>
    %c0_9 = arith.constant 0 : index
    %c0_10 = arith.constant 0 : index
    %18 = vector.load %arg3[%c0_9, %c0_10] : memref<1x128xf32, #tpu.memory_space<vmem>>, vector<1x128xf32>
    %19 = arith.mulf %4, %17 : vector<1x128xf32>
    %20 = arith.subf %18, %19 : vector<1x128xf32>
    %c0_11 = arith.constant 0 : index
    %c0_12 = arith.constant 0 : index
    %21 = vector.load %arg1[%c0_11, %c0_12] : memref<8x128xf32, #tpu.memory_space<vmem>>, vector<8x128xf32>
    %22 = vector.broadcast %17 : vector<1x128xf32> to vector<8x128xf32>
    %23 = arith.mulf %21, %22 : vector<8x128xf32>
    %24 = vector.broadcast %20 : vector<1x128xf32> to vector<8x128xf32>
    %25 = arith.addf %23, %24 : vector<8x128xf32>
    %c0_13 = arith.constant 0 : index
    %c0_14 = arith.constant 0 : index
    %26 = vector.load %arg4[%c0_13, %c0_14] : memref<8x128xf32, #tpu.memory_space<vmem>>, vector<8x128xf32>
    tpu.vector_store %arg4[%c0_13, %c0_14], %25 {strides = array<i32>} : memref<8x128xf32, #tpu.memory_space<vmem>>, vector<8x128xf32>,
    return
  }
  func.func @transform_0(%arg0: i32) -> (i32, i32) {
    %c0_i32 = arith.constant 0 : i32
    %c0_i32_0 = arith.constant 0 : i32
    return %c0_i32, %arg0 : i32, i32
  }
  func.func @transform_1(%arg0: i32) -> (i32, i32) {
    %c0_i32 = arith.constant 0 : i32
    %c0_i32_0 = arith.constant 0 : i32
    return %c0_i32, %arg0 : i32, i32
  }
  func.func @transform_2(%arg0: i32) -> (i32, i32) {
    %c0_i32 = arith.constant 0 : i32
    %c0_i32_0 = arith.constant 0 : i32
    return %c0_i32, %arg0 : i32, i32
  }
  func.func @transform_3(%arg0: i32) -> (i32, i32) {
    %c0_i32 = arith.constant 0 : i32
    %c0_i32_0 = arith.constant 0 : i32
    return %c0_i32, %arg0 : i32, i32
  }
}

</mosaic_0001>

<llo_original>
// kernel: tpu_custom_call.1
$region0: #{tpu_custom_call.1}
  #allocation0 [shape = 'u32[]', space=smem, size = 0x4, offset = 0x4, fixed_abs, tag = 'smem constant byte address 0x4 - core index']
  #allocation1 [shape = 'u32[144,128]{1,0:T(1,128)}', space=vmem, size = 0x12000, scoped, tag = 'internal scratch']
  %s0 = inlined_call_operand.hbm [shape: f32[8,256], index: 0, kind: input, shape index: {}]
  %s1 = inlined_call_operand.hbm [shape: f32[1,256], index: 1, kind: input, shape index: {}]
  %s2 = inlined_call_operand.vmem [shape: f32[1,256], index: 2, kind: input, shape index: {}]
  %s3 = inlined_call_operand.hbm [shape: f32[8,256], index: 3, kind: output, shape index: {}]
  %s4 = sld [smem:[#allocation0]]
  $region53: #{tpu_custom_call.1} parent=0
    _
  %s6 = ssub.s32 1, %s4
  %s7 = scalar_select 0, %s6, %s4
  $region1: #{tpu_custom_call.1} parent=0
    #allocation2 [shape = 'u8[8192]{0}', space=vmem, size = 0x2000, scoped, tag = 'input window, operand 0']
    #allocation3 [shape = 's32[2]{0}', space=sflag, size = 0x8, scoped, tag = 'scoped memory for tpu_custom_call.1']
    #allocation4 [shape = 's32[2]{0}', space=sflag, size = 0x8, scoped, tag = 'scoped memory for tpu_custom_call.1']
    #allocation5 [shape = 'u8[1024]{0}', space=vmem, size = 0x400, scoped, tag = 'input window, operand 1']
    #allocation6 [shape = 's32[2]{0}', space=sflag, size = 0x8, scoped, tag = 'scoped memory for tpu_custom_call.1']
    #allocation7 [shape = 'u8[8192]{0}', space=vmem, size = 0x2000, scoped, tag = 'output window, operand 0']
    %8 = vsyncpa [#allocation3], 0
    %s9 = scalar_lea.sflag [#allocation3], 1
    %10 = vsyncpa %s9, 0
    %11 = vsyncpa [#allocation6], 0
    %s12 = scalar_lea.sflag [#allocation6], 1
    %13 = vsyncpa %s12, 0
    %14 = vsyncpa [#allocation4], 0
    %s15 = scalar_lea.sflag [#allocation4], 1
    %16 = vsyncpa %s15, 0
    loop: start=0, step=1, limit=4
    $region2: #{tpu_custom_call.1} parent=1 // loop_pre_header
      _
    $region3: #{tpu_custom_call.1} parent=1 // loop_header
      %s18 = sphi 0, %s22
      %p19 = scmp.ge.s32.totalorder %s18, 4
      %s28 = sphi 0, %s30
      %s31 = sphi 0, %s28
      %s32 = sphi 0, %s31
      %s48 = sphi 0, %s32
      %s54 = sphi 0, %s56
      %s57 = sphi 0, %s54
      %s58 = sphi 0, %s57
      %s74 = sphi 0, %s58
      %s80 = sphi 0, %s82
      %s83 = sphi 0, %s80
      %s84 = sphi 0, %s83
      %s100 = sphi 0, %s84
      %s106 = sphi 0, %s108
      %s109 = sphi 0, %s106
      %s110 = sphi 0, %s109
      %s126 = sphi 0, %s110
    $region4: #{tpu_custom_call.1} parent=1 // loop_header_branch
      %21 = sbr.rel (%p19) target = $region8
    $region5: #{tpu_custom_call.1} parent=1 // loop_body
      %s23 = ssub.s32 %s18, 1
      %s24 = ssub.s32 %s18, 2
      %s25 = sadd.s32 %s18, 1
      %s26 = ssub.s32 %s18, %s25
      %p27 = scmp.eq.s32.totalorder %s26, 0
      %s29 = sadd.s32 %s28, 1
      %s30 = scalar_select %p27, %s28, %s29
      %p33 = pneg %p27
      %p34 = scmp.eq.s32.totalorder %s18, 1
      %p35 = por %p33, %p34
      %p36 = scmp.ne.s32.totalorder %s28, %s31
      %p37 = scmp.eq.s32.totalorder %s18, 0
      %p38 = por %p36, %p37
      %p39 = scmp.ne.s32.totalorder %s28, %s31
      %p40 = scmp.eq.s32.totalorder %s23, 1
      %p41 = por %p39, %p40
      %p42 = scmp.ne.s32.totalorder %s31, %s32
      %p43 = scmp.eq.s32.totalorder %s23, 0
      %p44 = por %p42, %p43
      %p45 = scmp.ne.s32.totalorder %s31, %s32
      %p46 = scmp.eq.s32.totalorder %s24, 1
      %p47 = por %p45, %p46
      %p49 = scmp.ne.s32.totalorder %s32, %s48
      %p50 = scmp.eq.s32.totalorder %s24, 0
      %p51 = por %p49, %p50
      %s52 = ssub.s32 %s18, %s25
      %p53 = scmp.eq.s32.totalorder %s52, 0
      %s55 = sadd.s32 %s54, 1
      %s56 = scalar_select %p53, %s54, %s55
      %p59 = pneg %p53
      %p60 = scmp.eq.s32.totalorder %s18, 1
      %p61 = por %p59, %p60
      %p62 = scmp.ne.s32.totalorder %s54, %s57
      %p63 = scmp.eq.s32.totalorder %s18, 0
      %p64 = por %p62, %p63
      %p65 = scmp.ne.s32.totalorder %s54, %s57
      %p66 = scmp.eq.s32.totalorder %s23, 1
      %p67 = por %p65, %p66
      %p68 = scmp.ne.s32.totalorder %s57, %s58
      %p69 = scmp.eq.s32.totalorder %s23, 0
      %p70 = por %p68, %p69
      %p71 = scmp.ne.s32.totalorder %s57, %s58
      %p72 = scmp.eq.s32.totalorder %s24, 1
      %p73 = por %p71, %p72
      %p75 = scmp.ne.s32.totalorder %s58, %s74
      %p76 = scmp.eq.s32.totalorder %s24, 0
      %p77 = por %p75, %p76
      %s78 = ssub.s32 %s18, %s25
      %p79 = scmp.eq.s32.totalorder %s78, 0
      %s81 = sadd.s32 %s80, 1
      %s82 = scalar_select %p79, %s80, %s81
      %p85 = pneg %p79
      %p86 = scmp.eq.s32.totalorder %s18, 1
      %p87 = por %p85, %p86
      %p88 = scmp.ne.s32.totalorder %s80, %s83
      %p89 = scmp.eq.s32.totalorder %s18, 0
      %p90 = por %p88, %p89
      %p91 = scmp.ne.s32.totalorder %s80, %s83
      %p92 = scmp.eq.s32.totalorder %s23, 1
      %p93 = por %p91, %p92
      %p94 = scmp.ne.s32.totalorder %s83, %s84
      %p95 = scmp.eq.s32.totalorder %s23, 0
      %p96 = por %p94, %p95
      %p97 = scmp.ne.s32.totalorder %s83, %s84
      %p98 = scmp.eq.s32.totalorder %s24, 1
      %p99 = por %p97, %p98
      %p101 = scmp.ne.s32.totalorder %s84, %s100
      %p102 = scmp.eq.s32.totalorder %s24, 0
      %p103 = por %p101, %p102
      %s104 = ssub.s32 %s18, %s25
      %p105 = scmp.eq.s32.totalorder %s104, 0
      %s107 = sadd.s32 %s106, 1
      %s108 = scalar_select %p105, %s106, %s107
      %p111 = pneg %p105
      %p112 = scmp.eq.s32.totalorder %s18, 1
      %p113 = por %p111, %p112
      %p114 = scmp.ne.s32.totalorder %s106, %s109
      %p115 = scmp.eq.s32.totalorder %s18, 0
      %p116 = por %p114, %p115
      %p117 = scmp.ne.s32.totalorder %s106, %s109
      %p118 = scmp.eq.s32.totalorder %s23, 1
      %p119 = por %p117, %p118
      %p120 = scmp.ne.s32.totalorder %s109, %s110
      %p121 = scmp.eq.s32.totalorder %s23, 0
      %p122 = por %p120, %p121
      %p123 = scmp.ne.s32.totalorder %s109, %s110
      %p124 = scmp.eq.s32.totalorder %s24, 1
      %p125 = por %p123, %p124
      %p127 = scmp.ne.s32.totalorder %s110, %s126
      %p128 = scmp.eq.s32.totalorder %s24, 0
      %p129 = por %p127, %p128
      %p130 = scmp.le.s32.totalorder 1, %s18
      %p131 = scmp.lt.s32.totalorder %s18, 3
      %p132 = pnand %p130, %p131
      %p133 = pneg %p132
      // Predicated region
      $region9: #{tpu_custom_call.1} parent=5 // pred_check
        _
      $region10: #{tpu_custom_call.1} parent=5 // pred_check_branch
        %135 = sbr.rel (%p132) target = $region12
      $region11: #{tpu_custom_call.1} parent=5 // pred_region
        %s136 = ssub.s32 %s18, 1
      $region12: #{tpu_custom_call.1} parent=5 // pred_fallthru
        _
      %p137 = scmp.lt.s32.totalorder %s18, 2
      // Predicated region
      $region13: #{tpu_custom_call.1} parent=5 // pred_check
        %p138 = pneg %p137
      $region14: #{tpu_custom_call.1} parent=5 // pred_check_branch
        %140 = sbr.rel (%p138) target = $region16
      $region15: #{tpu_custom_call.1} parent=5 // pred_region
        // Predicated region
        $region17: #{tpu_custom_call.1} parent=15 // pred_check
          %p141 = pneg %p38
        $region18: #{tpu_custom_call.1} parent=15 // pred_check_branch
          %143 = sbr.rel (%p141) target = $region20
        $region19: #{tpu_custom_call.1} parent=15 // pred_region
          %s144 = sand.u32 %s28, 1
          %s145 = scalar_lea.sflag [#allocation3], %s144
          %s146 = sand.u32 %s28, 1
          %s147 = smul.addr %s146, 8
          %s148 = scalar_lea.vmem [#allocation2], %s147
          %s150 = ssub.s32 128, 128
          %151 = vsyncadd %s145, %s150
          %s152 = smul.addr %s18, 128
          %s153 = scalar_lea.hbm %s0, %s152
          %s155 = sshll.u32 %s148, 4
          %s156 = int_to_ptr.vmem [resolvable:$true] %s155
          %158 = dma.hbm_to_vmem [thread:$0]  %s153, 128, %s156, %s145
        $region20: #{tpu_custom_call.1} parent=15 // pred_fallthru
          _
        // Predicated region
        $region21: #{tpu_custom_call.1} parent=15 // pred_check
          %p159 = pneg %p64
        $region22: #{tpu_custom_call.1} parent=15 // pred_check_branch
          %161 = sbr.rel (%p159) target = $region24
        $region23: #{tpu_custom_call.1} parent=15 // pred_region
          %s162 = sand.u32 %s54, 1
          %s163 = scalar_lea.sflag [#allocation6], %s162
          %s164 = sand.u32 %s54, 1
          %s165 = scalar_lea.vmem [#allocation5], %s164
          %s167 = ssub.s32 16, 16
          %168 = vsyncadd %s163, %s167
          %s169 = smul.addr %s18, 16
          %s170 = scalar_lea.hbm %s1, %s169
          %s172 = sshll.u32 %s165, 4
          %s173 = int_to_ptr.vmem [resolvable:$true] %s172
          %175 = dma.hbm_to_vmem [thread:$0]  %s170, 16, %s173, %s163
        $region24: #{tpu_custom_call.1} parent=15 // pred_fallthru
          _
        // Predicated region
        $region25: #{tpu_custom_call.1} parent=15 // pred_check
          %p176 = pneg %p90
        $region26: #{tpu_custom_call.1} parent=15 // pred_check_branch
          %178 = sbr.rel (%p176) target = $region28
        $region27: #{tpu_custom_call.1} parent=15 // pred_region
          %p179 = scmp.lt.s32.totalorder %s18, 1
          %s180 = scalar_select %p179, %s18, 1
          %s181 = scalar_lea.vmem %s2, %s180
        $region28: #{tpu_custom_call.1} parent=15 // pred_fallthru
          _
      $region16: #{tpu_custom_call.1} parent=5 // pred_fallthru
        _
      %p182 = scmp.le.s32.totalorder 1, %s18
      %p183 = scmp.lt.s32.totalorder %s18, 3
      %p184 = pnand %p182, %p183
      %p185 = pneg %p184
      // Predicated region
      $region29: #{tpu_custom_call.1} parent=5 // pred_check
        _
      $region30: #{tpu_custom_call.1} parent=5 // pred_check_branch
        %187 = sbr.rel (%p184) target = $region32
      $region31: #{tpu_custom_call.1} parent=5 // pred_region
        %s188 = ssub.s32 %s18, 1
        %s189 = sand.u32 %s31, 1
        %s190 = scalar_lea.sflag [#allocation3], %s189
        %s191 = sand.u32 %s31, 1
        %s192 = smul.addr %s191, 8
        %s193 = scalar_lea.vmem [#allocation2], %s192
        // Predicated region
        $region33: #{tpu_custom_call.1} parent=31 // pred_check
          %p194 = pneg %p44
        $region34: #{tpu_custom_call.1} parent=31 // pred_check_branch
          %196 = sbr.rel (%p194) target = $region36
        $region35: #{tpu_custom_call.1} parent=31 // pred_region
          %197 = dma.done %s190, 128
        $region36: #{tpu_custom_call.1} parent=31 // pred_fallthru
          _
        %s198 = sand.u32 %s57, 1
        %s199 = scalar_lea.sflag [#allocation6], %s198
        %s200 = sand.u32 %s57, 1
        %s201 = scalar_lea.vmem [#allocation5], %s200
        // Predicated region
        $region37: #{tpu_custom_call.1} parent=31 // pred_check
          %p202 = pneg %p70
        $region38: #{tpu_custom_call.1} parent=31 // pred_check_branch
          %204 = sbr.rel (%p202) target = $region40
        $region39: #{tpu_custom_call.1} parent=31 // pred_region
          %205 = dma.done %s199, 16
        $region40: #{tpu_custom_call.1} parent=31 // pred_fallthru
          _
        %s206 = sand.u32 %s31, 1
        %s207 = scalar_lea.sflag [#allocation3], %s206
        %s208 = sand.u32 %s31, 1
        %s209 = smul.addr %s208, 8
        %s210 = scalar_lea.vmem [#allocation2], %s209
        %p211 = pneg %p44
        %p212 = pneg %p41
        %s213 = sand.u32 %s57, 1
        %s214 = scalar_lea.sflag [#allocation6], %s213
        %s215 = sand.u32 %s57, 1
        %s216 = scalar_lea.vmem [#allocation5], %s215
        %p217 = pneg %p70
        %p218 = pneg %p67
        %p219 = scmp.lt.s32.totalorder %s23, 1
        %s220 = scalar_select %p219, %s23, 1
        %s221 = scalar_lea.vmem %s2, %s220
        %p222 = pneg %p96
        %p223 = pneg %p93
        %p224 = pneg %p122
        %p225 = pneg %p119
        %s226 = sand.u32 %s109, 1
        %s227 = scalar_lea.sflag [#allocation4], %s226
        %s228 = sand.u32 %s109, 1
        %s229 = smul.addr %s228, 8
        %s230 = scalar_lea.vmem [#allocation7], %s229
        %p231 = scmp.lt.s32.totalorder %s23, 1
        %s232 = scalar_select %p231, %s23, 1
        %s233 = scalar_lea.vmem %s2, %s232
        %v234 = vld [vmem:[%s193] sm:$0xff]
        %v235 = vrot.slane %v234, 4
        %v236 = vadd.f32 %v234, %v235
        %v237 = vrot.slane %v236, 2
        %v238 = vadd.f32 %v236, %v237
        %v239 = vrot.slane %v238, 1
        %v240 = vadd.f32 %v238, %v239
        %v241 = vmul.f32 %v240, 0.125
        %v242 = vsub.f32 %v234, %v241
        %v243 = vmul.f32 %v242, %v242
        %v244 = vrot.slane %v243, 4
        %v245 = vadd.f32 %v243, %v244
        %v246 = vrot.slane %v245, 2
        %v247 = vadd.f32 %v245, %v246
        %v248 = vrot.slane %v247, 1
        %v249 = vadd.f32 %v247, %v248
        %v250 = vmul.f32 %v249, 0.125
        %v251 = vadd.f32 %v250, 1e-05
        %v252 = vrsqrt.pop %v251
        %v253 = vld [vmem:[%s201] sm:$0x1]
        %v254 = vmul.f32 %v253, %v252
        %v255 = vld [vmem:[%s233] sm:$0x1]
        %v256 = vmul.f32 %v241, %v254
        %v257 = vsub.f32 %v255, %v256
        %v259 = vlaneseq
        %v260 = vshrl.u32 %v259, 7
        %v261 = vsub.s32 0, %v260
        %v262 = vrot.slane %v254, %v261
        %v264 = vmul.f32 %v234, %v262
        %v266 = vlaneseq
        %v267 = vshrl.u32 %v266, 7
        %v268 = vsub.s32 0, %v267
        %v269 = vrot.slane %v257, %v268
        %v271 = vadd.f32 %v264, %v269
        %272 = vst [vmem:[%s230] sm:$0xff] %v271
        %s273 = sand.u32 %s109, 1
        %s274 = scalar_lea.sflag [#allocation4], %s273
        %s275 = sand.u32 %s109, 1
        %s276 = smul.addr %s275, 8
        %s277 = scalar_lea.vmem [#allocation7], %s276
        // Predicated region
        $region41: #{tpu_custom_call.1} parent=31 // pred_check
          %p278 = pneg %p119
        $region42: #{tpu_custom_call.1} parent=31 // pred_check_branch
          %280 = sbr.rel (%p278) target = $region44
        $region43: #{tpu_custom_call.1} parent=31 // pred_region
          %s282 = ssub.s32 128, 128
          %283 = vsyncadd %s274, %s282
          %s284 = smul.addr %s23, 128
          %s285 = scalar_lea.hbm %s3, %s284
          %s287 = sshll.u32 %s277, 4
          %s288 = int_to_ptr.vmem [resolvable:$true] %s287
          %290 = dma.vmem_to_hbm [thread:$0]  %s288, 128, %s285, %s274
        $region44: #{tpu_custom_call.1} parent=31 // pred_fallthru
          _
      $region32: #{tpu_custom_call.1} parent=5 // pred_fallthru
        _
      %p291 = scmp.le.s32.totalorder 2, %s18
      // Predicated region
      $region45: #{tpu_custom_call.1} parent=5 // pred_check
        %p292 = pneg %p291
      $region46: #{tpu_custom_call.1} parent=5 // pred_check_branch
        %294 = sbr.rel (%p292) target = $region48
      $region47: #{tpu_custom_call.1} parent=5 // pred_region
        %s295 = ssub.s32 %s18, 2
        // Predicated region
        $region49: #{tpu_custom_call.1} parent=47 // pred_check
          %p296 = pneg %p125
        $region50: #{tpu_custom_call.1} parent=47 // pred_check_branch
          %298 = sbr.rel (%p296) target = $region52
        $region51: #{tpu_custom_call.1} parent=47 // pred_region
          %s299 = sand.u32 %s110, 1
          %s300 = scalar_lea.sflag [#allocation4], %s299
          %s301 = sand.u32 %s110, 1
          %s302 = smul.addr %s301, 8
          %s303 = scalar_lea.vmem [#allocation7], %s302
          %304 = dma.done %s300, 128
        $region52: #{tpu_custom_call.1} parent=47 // pred_fallthru
          _
      $region48: #{tpu_custom_call.1} parent=5 // pred_fallthru
        _
    $region6: #{tpu_custom_call.1} parent=1 // loop_footer
      %s22 = sadd.s32 1, %s18
    $region7: #{tpu_custom_call.1} parent=1 // loop_footer_branch
      %17 = sbr.rel target = $region3
    $region8: #{tpu_custom_call.1} parent=1 // loop_exit
      _
    %305 = vsyncpa [#allocation3], 1
    %s306 = scalar_lea.sflag [#allocation3], 1
    %307 = vsyncpa %s306, 1
    %308 = vsyncpa [#allocation6], 1
    %s309 = scalar_lea.sflag [#allocation6], 1
    %310 = vsyncpa %s309, 1
    %311 = vsyncpa [#allocation4], 1
    %s312 = scalar_lea.sflag [#allocation4], 1
    %313 = vsyncpa %s312, 1

</llo_original>
